<compile_context>
chip_gen: v6e
topology: v6e:2x2x1
jax: 0.10.0
libtpu: 0.0.40
codegen_flags: <defaults>
</compile_context>

<pallas_src>
import functools

import jax
import jax.numpy as jnp
from jax.experimental import pallas as pl
from jax.experimental.pallas import tpu as pltpu

_NEG_FILL = -1e30  # never wins a max; exp() underflows to exactly 0


def _label_smoothing_kernel(pred_ref, tgt_ref, out_ref, *, num_classes,
                            smooth_val, confidence, batch):
    """One batch tile -> per-row smoothed-CE losses (un-normalized).

    pred_ref: (TILE_B, C) float VMEM (classes on the lane axis, source dtype)
    tgt_ref : (TILE_B, 1) int32 VMEM
    out_ref : (TILE_B, 1) f32   VMEM  (rows past the true batch are zeroed)
    """
    pred = pred_ref[...]                       # (TB, C), source dtype (f32/bf16)
    tgt = tgt_ref[...]                         # (TB, 1) int32
    tb, c = pred.shape

    # Single shared class-index iota, built at (1, C) and broadcast.
    col = jax.lax.broadcasted_iota(jnp.int32, (1, c), 1)

    if num_classes % 128 != 0:
        # C is not lane-aligned: guard reductions against physical pad lanes.
        valid = col < num_classes                                   # (1, C)
        p_max = jnp.where(valid, pred, jnp.asarray(_NEG_FILL, pred.dtype))
        p_sum = jnp.where(valid, pred, jnp.asarray(0, pred.dtype))
    else:
        p_max = pred
        p_sum = pred

    # Numerically stable logsumexp along the class (lane) axis.
    # Max is exact in the source dtype; accumulate the exp-sum in f32.
    m = jnp.max(p_max, axis=-1, keepdims=True)                      # (TB, 1)
    e = jnp.exp((p_max - m).astype(jnp.float32))                    # fused cast
    lse = jnp.log(jnp.sum(e, axis=-1, keepdims=True)) + m.astype(jnp.float32)

    # sum_c pred and pred at the target class (f32 accumulation).
    sum_pred = jnp.sum(p_sum.astype(jnp.float32), axis=-1, keepdims=True)
    tgt_pred = jnp.sum(jnp.where(col == tgt, pred, jnp.asarray(0, pred.dtype)),
                       axis=-1, keepdims=True).astype(jnp.float32)

    # loss_row = -( s * sum_c logp + (conf - s) * logp[tgt] )
    #          = (s*(C-1)+conf)*lse - s*sum_c(pred) - (conf-s)*pred[tgt]
    lse_coeff = smooth_val * (num_classes - 1) + confidence          # == 1.0
    loss = (lse_coeff * lse
            - smooth_val * sum_pred
            - (confidence - smooth_val) * tgt_pred)                  # (TB, 1)

    # Zero rows past the true batch (garbage from edge-block OOB reads), so
    # the wrapper can take a plain full sum.
    row = (pl.program_id(0) * tb
           + jax.lax.broadcasted_iota(jnp.int32, (tb, 1), 0))
    out_ref[...] = jnp.where(row < batch, loss, 0.0)


def label_smoothing_loss(pred, target, *, classes, smoothing=0.0,
                         tile_b=128, vmem_limit_bytes=48 * 1024 * 1024):
    """pred: (B, classes) float (f32 or bf16), target: (B,) int -> scalar f32.

    tile_b: batch rows per grid step (rounded to the dtype sublane multiple).
      128 (f32) keeps the double-buffered input + intermediates comfortably
      inside 48 MiB scoped VMEM on v5e/v6e/v7x while each DMA step is still
      multiple MiB (>> the ~0.35us per-step overhead).  For bf16 inputs, 256
      is safe and slightly better on v7x.
    """
    B, C = pred.shape
    assert C == classes, (C, classes)
    assert classes >= 2, "smoothing/(classes-1) requires classes >= 2"
    confidence = 1.0 - smoothing
    smooth_val = smoothing / (classes - 1)

    itemsize = jnp.dtype(pred.dtype).itemsize
    sublane = {4: 8, 2: 16, 1: 32}.get(itemsize, 8)
    # Round tile_b down to the packing-native sublane multiple; don't exceed
    # the batch rounded up to that multiple.
    tile_b = max(sublane, (int(tile_b) // sublane) * sublane)
    tile_b = min(tile_b, int(pl.cdiv(B, sublane)) * sublane)
    num_tiles = int(pl.cdiv(B, tile_b))

    tgt2d = target.astype(jnp.int32).reshape(B, 1)

    kernel = functools.partial(
        _label_smoothing_kernel,
        num_classes=classes, smooth_val=smooth_val,
        confidence=confidence, batch=B)

    cost = pl.CostEstimate(
        flops=9 * B * C,
        transcendentals=B * C,
        bytes_accessed=B * C * itemsize + B * 4 + num_tiles * tile_b * 4)

    per_row = pl.pallas_call(
        kernel,
        out_shape=jax.ShapeDtypeStruct((num_tiles * tile_b, 1), jnp.float32),
        grid_spec=pltpu.PrefetchScalarGridSpec(
            num_scalar_prefetch=0,
            grid=(num_tiles,),
            in_specs=[
                # Full class dim as the block's last dim (no padding copy);
                # batch edge handled by Pallas via the cdiv grid.
                pl.BlockSpec((tile_b, C), lambda i: (i, 0)),
                pl.BlockSpec((tile_b, 1), lambda i: (i, 0)),
            ],
            out_specs=pl.BlockSpec((tile_b, 1), lambda i: (i, 0)),
        ),
        compiler_params=pltpu.CompilerParams(
            # Per-tile outputs are independent -> shard across TCs on v7x.
            dimension_semantics=("parallel",),
            vmem_limit_bytes=vmem_limit_bytes),
        cost_estimate=cost,
    )(pred, tgt2d)

    # Invalid rows were zeroed in-kernel; single mean in the wrapper.
    return jnp.sum(per_row) / B


def _reference(pred, target, classes, smoothing):
    confidence = 1.0 - smoothing
    logp = jax.nn.log_softmax(pred.astype(jnp.float32), axis=-1)
    true_dist = jnp.full_like(logp, smoothing / (classes - 1))
    onehot = jax.nn.one_hot(target, classes, dtype=jnp.bool_)
    true_dist = jnp.where(onehot, confidence, true_dist)
    return jnp.mean(jnp.sum(-true_dist * logp, axis=-1))


if __name__ == "__main__":
    # Small synthetic shapes (module default classes=11014 shrunk for demo).
    # B=10 / CLASSES=500 exercise both the batch-edge block (10 -> tiles of 8)
    # and the unaligned class dim (500, not a multiple of 128) with no padding.
    B, CLASSES = 10, 500
    SMOOTHING = 0.1

    key = jax.random.PRNGKey(0)
    kp, kt = jax.random.split(key)
    pred = jax.random.normal(kp, (B, CLASSES), dtype=jnp.float32)
    target = jax.random.randint(kt, (B,), 0, CLASSES, dtype=jnp.int32)

    # Multi-tile path (2 batch tiles, second one partial).
    loss = label_smoothing_loss(pred, target, classes=CLASSES,
                                smoothing=SMOOTHING, tile_b=8)
    loss = jax.block_until_ready(loss)
    ref = _reference(pred, target, CLASSES, SMOOTHING)
    assert jnp.allclose(loss, ref, atol=1e-4, rtol=1e-4), (loss, ref)

    # Default-tile path + smoothing=0 (degenerates to plain cross-entropy).
    loss0 = label_smoothing_loss(pred, target, classes=CLASSES, smoothing=0.0)
    loss0 = jax.block_until_ready(loss0)
    ref0 = _reference(pred, target, CLASSES, 0.0)
    assert jnp.allclose(loss0, ref0, atol=1e-4, rtol=1e-4), (loss0, ref0)

    print("KERNEL_OK")
</pallas_src>

<mosaic_0001>
module attributes {stable_mosaic.version = 11 : i64} {
  func.func @_label_smoothing_kernel(%arg0: i32, %arg1: memref<8x500xf32, #tpu.memory_space<vmem>>, %arg2: memref<8x1xi32, #tpu.memory_space<vmem>>, %arg3: memref<8x1xf32, #tpu.memory_space<vmem>>) attributes {dimension_semantics = [#tpu.dimension_semantics<parallel>], iteration_bounds = array<i64: 2>, scalar_prefetch = 0 : i64, scratch_operands = 0 : i64, tpu.core_type = #tpu.core_type<tc>, window_params = [{transform_indices = @transform_0, window_bounds = array<i64: 8, 500>}, {transform_indices = @transform_1, window_bounds = array<i64: 8, 1>}, {transform_indices = @transform_2, window_bounds = array<i64: 8, 1>}]} {
    %c0 = arith.constant 0 : index
    %c0_0 = arith.constant 0 : index
    %0 = vector.load %arg1[%c0, %c0_0] : memref<8x500xf32, #tpu.memory_space<vmem>>, vector<8x500xf32>
    %c0_1 = arith.constant 0 : index
    %c0_2 = arith.constant 0 : index
    %1 = vector.load %arg2[%c0_1, %c0_2] : memref<8x1xi32, #tpu.memory_space<vmem>>, vector<8x1xi32>
    %2 = tpu.iota {dimensions = array<i32: 1>} : vector<1x500xi32>
    %c500_i32 = arith.constant 500 : i32
    %3 = vector.broadcast %c500_i32 : i32 to vector<1x500xi32>
    %4 = arith.cmpi slt, %2, %3 : vector<1x500xi32>
    %cst = arith.constant -1.000000e+30 : f32
    %5 = vector.shape_cast %4 : vector<1x500xi1> to vector<1x500xi1>
    %6 = vector.broadcast %5 : vector<1x500xi1> to vector<8x500xi1>
    %7 = vector.broadcast %cst : f32 to vector<8x500xf32>
    %8 = arith.select %6, %0, %7 : vector<8x500xi1>, vector<8x500xf32>
    %cst_3 = arith.constant 0.000000e+00 : f32
    %9 = vector.shape_cast %4 : vector<1x500xi1> to vector<1x500xi1>
    %10 = vector.broadcast %9 : vector<1x500xi1> to vector<8x500xi1>
    %11 = vector.broadcast %cst_3 : f32 to vector<8x500xf32>
    %12 = arith.select %10, %0, %11 : vector<8x500xi1>, vector<8x500xf32>
    %cst_4 = arith.constant dense<0xFF800000> : vector<8xf32>
    %13 = vector.multi_reduction <maximumf>, %8, %cst_4 [1] : vector<8x500xf32> to vector<8xf32>
    %14 = vector.shape_cast %13 : vector<8xf32> to vector<8x1xf32>
    %15 = vector.broadcast %14 : vector<8x1xf32> to vector<8x500xf32>
    %16 = arith.subf %8, %15 : vector<8x500xf32>
    %17 = math.exp %16 : vector<8x500xf32>
    %cst_5 = arith.constant dense<0.000000e+00> : vector<8xf32>
    %18 = vector.multi_reduction <add>, %17, %cst_5 [1] : vector<8x500xf32> to vector<8xf32>
    %19 = vector.shape_cast %18 : vector<8xf32> to vector<8x1xf32>
    %20 = math.log %19 : vector<8x1xf32>
    %21 = arith.addf %20, %14 : vector<8x1xf32>
    %cst_6 = arith.constant dense<0.000000e+00> : vector<8xf32>
    %22 = vector.multi_reduction <add>, %12, %cst_6 [1] : vector<8x500xf32> to vector<8xf32>
    %23 = vector.shape_cast %22 : vector<8xf32> to vector<8x1xf32>
    %24 = vector.broadcast %2 : vector<1x500xi32> to vector<8x500xi32>
    %25 = vector.broadcast %1 : vector<8x1xi32> to vector<8x500xi32>
    %26 = arith.cmpi eq, %24, %25 : vector<8x500xi32>
    %cst_7 = arith.constant 0.000000e+00 : f32
    %27 = vector.broadcast %cst_7 : f32 to vector<8x500xf32>
    %28 = arith.select %26, %0, %27 : vector<8x500xi1>, vector<8x500xf32>
    %cst_8 = arith.constant dense<0.000000e+00> : vector<8xf32>
    %29 = vector.multi_reduction <add>, %28, %cst_8 [1] : vector<8x500xf32> to vector<8xf32>
    %30 = vector.shape_cast %29 : vector<8xf32> to vector<8x1xf32>
    %cst_9 = arith.constant 1.000000e+00 : f32
    %31 = vector.broadcast %cst_9 : f32 to vector<8x1xf32>
    %32 = arith.mulf %31, %21 : vector<8x1xf32>
    %cst_10 = arith.constant 2.00400798E-4 : f32
    %33 = vector.broadcast %cst_10 : f32 to vector<8x1xf32>
    %34 = arith.mulf %33, %23 : vector<8x1xf32>
    %35 = arith.subf %32, %34 : vector<8x1xf32>
    %cst_11 = arith.constant 0.899799585 : f32
    %36 = vector.broadcast %cst_11 : f32 to vector<8x1xf32>
    %37 = arith.mulf %36, %30 : vector<8x1xf32>
    %38 = arith.subf %35, %37 : vector<8x1xf32>
    %c8_i32 = arith.constant 8 : i32
    %39 = arith.muli %arg0, %c8_i32 : i32
    %40 = tpu.iota {dimensions = array<i32: 0>} : vector<8x1xi32>
    %41 = vector.broadcast %39 : i32 to vector<8x1xi32>
    %42 = arith.addi %41, %40 : vector<8x1xi32>
    %c10_i32 = arith.constant 10 : i32
    %43 = vector.broadcast %c10_i32 : i32 to vector<8x1xi32>
    %44 = arith.cmpi slt, %42, %43 : vector<8x1xi32>
    %cst_12 = arith.constant 0.000000e+00 : f32
    %45 = vector.broadcast %cst_12 : f32 to vector<8x1xf32>
    %46 = arith.select %44, %38, %45 : vector<8x1xi1>, vector<8x1xf32>
    %c0_13 = arith.constant 0 : index
    %c0_14 = arith.constant 0 : index
    %47 = vector.load %arg3[%c0_13, %c0_14] : memref<8x1xf32, #tpu.memory_space<vmem>>, vector<8x1xf32>
    tpu.vector_store %arg3[%c0_13, %c0_14], %46 {strides = array<i32>} : memref<8x1xf32, #tpu.memory_space<vmem>>, vector<8x1xf32>,
    return
  }
  func.func @transform_0(%arg0: i32) -> (i32, i32) {
    %c0_i32 = arith.constant 0 : i32
    %c0_i32_0 = arith.constant 0 : i32
    return %arg0, %c0_i32 : i32, i32
  }
  func.func @transform_1(%arg0: i32) -> (i32, i32) {
    %c0_i32 = arith.constant 0 : i32
    %c0_i32_0 = arith.constant 0 : i32
    return %arg0, %c0_i32 : i32, i32
  }
  func.func @transform_2(%arg0: i32) -> (i32, i32) {
    %c0_i32 = arith.constant 0 : i32
    %c0_i32_0 = arith.constant 0 : i32
    return %arg0, %c0_i32 : i32, i32
  }
}

</mosaic_0001>

<llo_original>
// kernel: tpu_custom_call.1
$region0: #{tpu_custom_call.1}
  #allocation0 [shape = 'u32[]', space=smem, size = 0x4, offset = 0x4, fixed_abs, tag = 'smem constant byte address 0x4 - core index']
  #allocation1 [shape = 'u32[144,128]{1,0:T(1,128)}', space=vmem, size = 0x12000, scoped, tag = 'internal scratch']
  %s0 = inlined_call_operand.hbm [shape: f32[10,500], index: 0, kind: input, shape index: {}]
  %s1 = inlined_call_operand.vmem [shape: s32[10,1], index: 1, kind: input, shape index: {}]
  %s2 = inlined_call_operand.vmem [shape: f32[16,1], index: 2, kind: output, shape index: {}]
  %s3 = sld [smem:[#allocation0]]
  $region45: #{tpu_custom_call.1} parent=0
    _
  %s5 = ssub.s32 1, %s3
  %s6 = scalar_select 0, %s5, %s3
  $region1: #{tpu_custom_call.1} parent=0
    #allocation2 [shape = 'u8[32768]{0}', space=vmem, size = 0x8000, scoped, tag = 'input window, operand 0']
    #allocation3 [shape = 's32[2]{0}', space=sflag, size = 0x8, scoped, tag = 'scoped memory for tpu_custom_call.1']
    %7 = vsyncpa [#allocation3], 0
    %s8 = scalar_lea.sflag [#allocation3], 1
    %9 = vsyncpa %s8, 0
    loop: start=0, step=1, limit=4
    $region2: #{tpu_custom_call.1} parent=1 // loop_pre_header
      _
    $region3: #{tpu_custom_call.1} parent=1 // loop_header
      %s11 = sphi 0, %s15
      %p12 = scmp.ge.s32.totalorder %s11, 4
      %s21 = sphi 0, %s23
      %s24 = sphi 0, %s21
      %s25 = sphi 0, %s24
      %s41 = sphi 0, %s25
      %s47 = sphi 0, %s49
      %s50 = sphi 0, %s47
      %s51 = sphi 0, %s50
      %s67 = sphi 0, %s51
      %s73 = sphi 0, %s75
      %s76 = sphi 0, %s73
      %s77 = sphi 0, %s76
      %s93 = sphi 0, %s77
    $region4: #{tpu_custom_call.1} parent=1 // loop_header_branch
      %14 = sbr.rel (%p12) target = $region8
    $region5: #{tpu_custom_call.1} parent=1 // loop_body
      %s16 = ssub.s32 %s11, 1
      %s17 = ssub.s32 %s11, 2
      %s18 = sadd.s32 %s11, 1
      %s19 = ssub.s32 %s11, %s18
      %p20 = scmp.eq.s32.totalorder %s19, 0
      %s22 = sadd.s32 %s21, 1
      %s23 = scalar_select %p20, %s21, %s22
      %p26 = pneg %p20
      %p27 = scmp.eq.s32.totalorder %s11, 1
      %p28 = por %p26, %p27
      %p29 = scmp.ne.s32.totalorder %s21, %s24
      %p30 = scmp.eq.s32.totalorder %s11, 0
      %p31 = por %p29, %p30
      %p32 = scmp.ne.s32.totalorder %s21, %s24
      %p33 = scmp.eq.s32.totalorder %s16, 1
      %p34 = por %p32, %p33
      %p35 = scmp.ne.s32.totalorder %s24, %s25
      %p36 = scmp.eq.s32.totalorder %s16, 0
      %p37 = por %p35, %p36
      %p38 = scmp.ne.s32.totalorder %s24, %s25
      %p39 = scmp.eq.s32.totalorder %s17, 1
      %p40 = por %p38, %p39
      %p42 = scmp.ne.s32.totalorder %s25, %s41
      %p43 = scmp.eq.s32.totalorder %s17, 0
      %p44 = por %p42, %p43
      %s45 = ssub.s32 %s11, %s18
      %p46 = scmp.eq.s32.totalorder %s45, 0
      %s48 = sadd.s32 %s47, 1
      %s49 = scalar_select %p46, %s47, %s48
      %p52 = pneg %p46
      %p53 = scmp.eq.s32.totalorder %s11, 1
      %p54 = por %p52, %p53
      %p55 = scmp.ne.s32.totalorder %s47, %s50
      %p56 = scmp.eq.s32.totalorder %s11, 0
      %p57 = por %p55, %p56
      %p58 = scmp.ne.s32.totalorder %s47, %s50
      %p59 = scmp.eq.s32.totalorder %s16, 1
      %p60 = por %p58, %p59
      %p61 = scmp.ne.s32.totalorder %s50, %s51
      %p62 = scmp.eq.s32.totalorder %s16, 0
      %p63 = por %p61, %p62
      %p64 = scmp.ne.s32.totalorder %s50, %s51
      %p65 = scmp.eq.s32.totalorder %s17, 1
      %p66 = por %p64, %p65
      %p68 = scmp.ne.s32.totalorder %s51, %s67
      %p69 = scmp.eq.s32.totalorder %s17, 0
      %p70 = por %p68, %p69
      %s71 = ssub.s32 %s11, %s18
      %p72 = scmp.eq.s32.totalorder %s71, 0
      %s74 = sadd.s32 %s73, 1
      %s75 = scalar_select %p72, %s73, %s74
      %p78 = pneg %p72
      %p79 = scmp.eq.s32.totalorder %s11, 1
      %p80 = por %p78, %p79
      %p81 = scmp.ne.s32.totalorder %s73, %s76
      %p82 = scmp.eq.s32.totalorder %s11, 0
      %p83 = por %p81, %p82
      %p84 = scmp.ne.s32.totalorder %s73, %s76
      %p85 = scmp.eq.s32.totalorder %s16, 1
      %p86 = por %p84, %p85
      %p87 = scmp.ne.s32.totalorder %s76, %s77
      %p88 = scmp.eq.s32.totalorder %s16, 0
      %p89 = por %p87, %p88
      %p90 = scmp.ne.s32.totalorder %s76, %s77
      %p91 = scmp.eq.s32.totalorder %s17, 1
      %p92 = por %p90, %p91
      %p94 = scmp.ne.s32.totalorder %s77, %s93
      %p95 = scmp.eq.s32.totalorder %s17, 0
      %p96 = por %p94, %p95
      %p97 = scmp.le.s32.totalorder 1, %s11
      %p98 = scmp.lt.s32.totalorder %s11, 3
      %p99 = pnand %p97, %p98
      %p100 = pneg %p99
      // Predicated region
      $region9: #{tpu_custom_call.1} parent=5 // pred_check
        _
      $region10: #{tpu_custom_call.1} parent=5 // pred_check_branch
        %102 = sbr.rel (%p99) target = $region12
      $region11: #{tpu_custom_call.1} parent=5 // pred_region
        %s103 = ssub.s32 %s11, 1
      $region12: #{tpu_custom_call.1} parent=5 // pred_fallthru
        _
      %p104 = scmp.lt.s32.totalorder %s11, 2
      // Predicated region
      $region13: #{tpu_custom_call.1} parent=5 // pred_check
        %p105 = pneg %p104
      $region14: #{tpu_custom_call.1} parent=5 // pred_check_branch
        %107 = sbr.rel (%p105) target = $region16
      $region15: #{tpu_custom_call.1} parent=5 // pred_region
        // Predicated region
        $region17: #{tpu_custom_call.1} parent=15 // pred_check
          %p108 = pneg %p31
        $region18: #{tpu_custom_call.1} parent=15 // pred_check_branch
          %110 = sbr.rel (%p108) target = $region20
        $region19: #{tpu_custom_call.1} parent=15 // pred_region
          %s111 = sand.u32 %s21, 1
          %s112 = scalar_lea.sflag [#allocation3], %s111
          %s113 = sand.u32 %s21, 1
          %s114 = smul.addr %s113, 32
          %s115 = scalar_lea.vmem [#allocation2], %s114
          %s117 = ssub.s32 512, 512
          %118 = vsyncadd %s112, %s117
          %s119 = smul.addr %s11, 4
          %s120 = smul.addr %s119, 128
          %s121 = scalar_lea.hbm %s0, %s120
          %s123 = sshll.u32 %s115, 4
          %s124 = int_to_ptr.vmem [resolvable:$true] %s123
          %126 = dma.hbm_to_vmem [thread:$0]  %s121, 512, %s124, %s112
        $region20: #{tpu_custom_call.1} parent=15 // pred_fallthru
          _
        // Predicated region
        $region21: #{tpu_custom_call.1} parent=15 // pred_check
          %p127 = pneg %p57
        $region22: #{tpu_custom_call.1} parent=15 // pred_check_branch
          %129 = sbr.rel (%p127) target = $region24
        $region23: #{tpu_custom_call.1} parent=15 // pred_region
          %p130 = scmp.lt.s32.totalorder %s11, 1
          %s131 = scalar_select %p130, %s11, 1
          %s132 = smul.addr %s131, 8
          %s133 = scalar_lea.vmem %s1, %s132
        $region24: #{tpu_custom_call.1} parent=15 // pred_fallthru
          _
      $region16: #{tpu_custom_call.1} parent=5 // pred_fallthru
        _
      %p134 = scmp.le.s32.totalorder 1, %s11
      %p135 = scmp.lt.s32.totalorder %s11, 3
      %p136 = pnand %p134, %p135
      %p137 = pneg %p136
      // Predicated region
      $region25: #{tpu_custom_call.1} parent=5 // pred_check
        _
      $region26: #{tpu_custom_call.1} parent=5 // pred_check_branch
        %139 = sbr.rel (%p136) target = $region28
      $region27: #{tpu_custom_call.1} parent=5 // pred_region
        %s140 = ssub.s32 %s11, 1
        %s141 = sand.u32 %s24, 1
        %s142 = scalar_lea.sflag [#allocation3], %s141
        %s143 = sand.u32 %s24, 1
        %s144 = smul.addr %s143, 32
        %s145 = scalar_lea.vmem [#allocation2], %s144
        // Predicated region
        $region29: #{tpu_custom_call.1} parent=27 // pred_check
          %p146 = pneg %p37
        $region30: #{tpu_custom_call.1} parent=27 // pred_check_branch
          %148 = sbr.rel (%p146) target = $region32
        $region31: #{tpu_custom_call.1} parent=27 // pred_region
          %149 = dma.done %s142, 512
        $region32: #{tpu_custom_call.1} parent=27 // pred_fallthru
          _
        %s150 = sand.u32 %s24, 1
        %s151 = scalar_lea.sflag [#allocation3], %s150
        %s152 = sand.u32 %s24, 1
        %s153 = smul.addr %s152, 32
        %s154 = scalar_lea.vmem [#allocation2], %s153
        %p155 = pneg %p37
        %p156 = pneg %p34
        %p157 = scmp.lt.s32.totalorder %s16, 1
        %s158 = scalar_select %p157, %s16, 1
        %s159 = smul.addr %s158, 8
        %s160 = scalar_lea.vmem %s1, %s159
        %p161 = pneg %p63
        %p162 = pneg %p60
        %p163 = pneg %p89
        %p164 = pneg %p86
        %p165 = scmp.lt.s32.totalorder %s16, 1
        %s166 = scalar_select %p165, %s16, 1
        %s167 = smul.addr %s166, 8
        %s168 = scalar_lea.vmem %s2, %s167
        %p169 = scmp.lt.s32.totalorder %s16, 1
        %s170 = scalar_select %p169, %s16, 1
        %s171 = smul.addr %s170, 8
        %s172 = scalar_lea.vmem %s1, %s171
        %p173 = scmp.lt.s32.totalorder %s16, 1
        %s174 = scalar_select %p173, %s16, 1
        %s175 = smul.addr %s174, 8
        %s176 = scalar_lea.vmem %s2, %s175
        %v177 = vld [vmem:[%s145] sm:$0xff]
        %v178 = vld [vmem:[%s145 + $0x8] sm:$0xff]
        %v179 = vld [vmem:[%s145 + $0x10] sm:$0xff]
        %v180 = vld [vmem:[%s145 + $0x18] sm:$0xff]
        %v181 = vld [vmem:[%s172] sm:$0xff]
        %v182 = vlaneseq
        %v183 = vand.u32 %v182, 127
        %v184 = vadd.s32 %v183, 128
        %v185 = vadd.s32 %v183, 256
        %v186 = vadd.s32 %v183, 384
        %vm187 = vcmp.lt.s32.totalorder %v183, 500
        %vm188 = vcmp.lt.s32.totalorder %v184, 500
        %vm189 = vcmp.lt.s32.totalorder %v185, 500
        %vm190 = vcmp.lt.s32.totalorder %v186, 500
        %v191 = vsel %vm187, 1, 0
        %v192 = vsel %vm188, 1, 0
        %v193 = vsel %vm189, 1, 0
        %v194 = vsel %vm190, 1, 0
        %vm195 = vcmp.eq.s32.totalorder %v191, 1
        %vm196 = vcmp.eq.s32.totalorder %v192, 1
        %vm197 = vcmp.eq.s32.totalorder %v193, 1
        %vm198 = vcmp.eq.s32.totalorder %v194, 1
        %v199 = vsel %vm195, %v177, -1e+30
        %v200 = vsel %vm196, %v178, -1e+30
        %v201 = vsel %vm197, %v179, -1e+30
        %v202 = vsel %vm198, %v180, -1e+30
        %v203 = vsel %vm195, %v177, 0.0
        %v204 = vsel %vm196, %v178, 0.0
        %v205 = vsel %vm197, %v179, 0.0
        %v206 = vsel %vm198, %v180, 0.0
        %vm207 = vcmask 949248
        %v208 = vsel %vm207, %v202, -inf
        %v209 = vmax.f32 %v199, %v200
        %v210 = vmax.f32 %v201, %v208
        %v211 = vmax.f32 %v209, %v210
        %212 = vmax.xlane.f32.xlu0 %v211
        %v213 = vpop.xlane.xlu0 %212
        %v214 = vsub.f32 %v199, %v213
        %v215 = vsub.f32 %v200, %v213
        %v216 = vsub.f32 %v201, %v213
        %v217 = vsub.f32 %v202, %v213
        %v218 = vmul.f32 %v214, 1.442695
        %v219 = vpow.pop %v218
        %v220 = vmul.f32 %v215, 1.442695
        %v221 = vpow.pop %v220
        %v222 = vmul.f32 %v216, 1.442695
        %v223 = vpow.pop %v222
        %v224 = vmul.f32 %v217, 1.442695
        %v225 = vpow.pop %v224
        %v226 = vadd.f32 %v219, %v221
        %v227 = vadd.f32 %v226, %v223
        %v228 = vsel %vm207, %v225, 0.0
        %v229 = vadd.f32 %v227, %v228
        %230 = vadd.xlane.f32.xlu0 %v229
        %v231 = vpop.xlane.xlu0 %230
        %v232 = vlog2.pop %v231
        %v233 = vmul.f32 %v232, 0.6931472
        %v234 = vadd.f32 %v233, %v213
        %v235 = vadd.f32 %v203, %v204
        %v236 = vadd.f32 %v235, %v205
        %v237 = vsel %vm207, %v206, 0.0
        %v238 = vadd.f32 %v236, %v237
        %239 = vadd.xlane.f32.xlu0 %v238
        %v240 = vpop.xlane.xlu0 %239
        %241 = vset.pattern.permute.xlu0 0
        %242 = vperm.xlu0 %241, %v181
        %v243 = vpop.permute.xlu0 %242
        %vm244 = vcmp.eq.s32.totalorder %v183, %v243
        %vm245 = vcmp.eq.s32.totalorder %v184, %v243
        %vm246 = vcmp.eq.s32.totalorder %v185, %v243
        %vm247 = vcmp.eq.s32.totalorder %v186, %v243
        %v248 = vsel %vm244, %v177, 0.0
        %v249 = vsel %vm245, %v178, 0.0
        %v250 = vsel %vm246, %v179, 0.0
        %v251 = vsel %vm247, %v180, 0.0
        %v252 = vadd.f32 %v248, %v249
        %v253 = vadd.f32 %v252, %v250
        %v254 = vsel %vm207, %v251, 0.0
        %v255 = vadd.f32 %v253, %v254
        %256 = vadd.xlane.f32.xlu0 %v255
        %v257 = vpop.xlane.xlu0 %256
        %v258 = vmul.f32 %v240, 0.0002004008
        %v259 = vsub.f32 %v234, %v258
        %v260 = vmul.f32 %v257, 0.8997996
        %v261 = vsub.f32 %v259, %v260
        %s262 = smul.u32 %s16, 8
        %v263 = vlaneseq
        %v264 = vshrl.u32 %v263, 7
        %v265 = vstv %s262
        %v266 = vadd.s32 %v265, %v264
        %vm267 = vcmp.lt.s32.totalorder %v266, 10
        %v268 = vsel %vm267, %v261, 0.0
        %vm269 = vcmask 7168
        %270 = vst.msk [vmem:[%s176] sm:$0xff] %vm269, %v268
        %p271 = scmp.lt.s32.totalorder %s16, 1
        %s272 = scalar_select %p271, %s16, 1
        %s273 = smul.addr %s272, 8
        %s274 = scalar_lea.vmem %s2, %s273
        // Predicated region
        $region33: #{tpu_custom_call.1} parent=27 // pred_check
          %p275 = pneg %p86
        $region34: #{tpu_custom_call.1} parent=27 // pred_check_branch
          %277 = sbr.rel (%p275) target = $region36
        $region35: #{tpu_custom_call.1} parent=27 // pred_region
          _
        $region36: #{tpu_custom_call.1} parent=27 // pred_fallthru
          _
      $region28: #{tpu_custom_call.1} parent=5 // pred_fallthru
        _
      %p278 = scmp.le.s32.totalorder 2, %s11
      // Predicated region
      $region37: #{tpu_custom_call.1} parent=5 // pred_check
        %p279 = pneg %p278
      $region38: #{tpu_custom_call.1} parent=5 // pred_check_branch
        %281 = sbr.rel (%p279) target = $region40
      $region39: #{tpu_custom_call.1} parent=5 // pred_region
        %s282 = ssub.s32 %s11, 2
        // Predicated region
        $region41: #{tpu_custom_call.1} parent=39 // pred_check
          %p283 = pneg %p92
        $region42: #{tpu_custom_call.1} parent=39 // pred_check_branch
          %285 = sbr.rel (%p283) target = $region44
        $region43: #{tpu_custom_call.1} parent=39 // pred_region
          %p286 = scmp.lt.s32.totalorder %s17, 1
          %s287 = scalar_select %p286, %s17, 1
          %s288 = smul.addr %s287, 8
          %s289 = scalar_lea.vmem %s2, %s288
        $region44: #{tpu_custom_call.1} parent=39 // pred_fallthru
          _
      $region40: #{tpu_custom_call.1} parent=5 // pred_fallthru
        _
    $region6: #{tpu_custom_call.1} parent=1 // loop_footer
      %s15 = sadd.s32 1, %s11
    $region7: #{tpu_custom_call.1} parent=1 // loop_footer_branch
      %10 = sbr.rel target = $region3
    $region8: #{tpu_custom_call.1} parent=1 // loop_exit
      _
    %290 = vsyncpa [#allocation3], 1
    %s291 = scalar_lea.sflag [#allocation3], 1
    %292 = vsyncpa %s291, 1

</llo_original>
